<compile_context>
chip_gen: v6e
topology: v6e:2x2x1
jax: 0.10.0
libtpu: 0.0.40
codegen_flags: <defaults>
</compile_context>

<pallas_src>
import functools

import jax
import jax.numpy as jnp
from jax.experimental import pallas as pl
from jax.experimental.pallas import tpu as pltpu

LANES = 128  # padded per-layer width: lane-aligned slices, clean U stacking, dense output stores


def _round_up(n, m):
    return ((n + m - 1) // m) * m


def _rehu(v, d):
    """Rectified Huber: 0 for v<=0, v^2/(2d) for 0<=v<=d, v-d/2 for v>=d."""
    quad = jnp.clip((0.5 / d) * v * jnp.abs(v), 0.0, 0.5 * d)
    return jnp.maximum(quad, v - 0.5 * d)


def posdef_kernel(x_ref, w_ref, b_ref, u_ref, out_ref, *, nhidden, eps, d, maxval):
    """Fused PosDef forward on one batch tile.

    Packed operands (built in the wrapper, zero-padded so padded columns of every z stay exactly 0):
      x_ref : [TILE_B, insize]
      w_ref : [insize, (nhidden+1)*LANES]   inmap weight + all skip weights, concatenated
      b_ref : [1,      (nhidden+1)*LANES]   matching biases
      u_ref : [nhidden, LANES, LANES]       non-negative (relu'd) weights, stacked
      out   : [TILE_B, LANES]               lane-dense slab; wrapper slices [:, :out_features]
    """
    np_ = LANES
    x_f32 = x_ref[...].astype(jnp.float32)                 # elementwise path stays f32 (v5e-safe)
    x_mm = x_f32.astype(jnp.bfloat16)                      # MXU operands in bf16, f32 accumulation
    w_mm = w_ref[...].astype(jnp.bfloat16)
    b = b_ref[...]                                         # f32

    # One fused skip matmul for inmap + every per-layer x-path; sliced per layer below.
    px_all = jnp.dot(x_mm, w_mm, preferred_element_type=jnp.float32) + b

    z = jnp.maximum(px_all[:, 0:np_], 0.0)                 # g(x) state, [TILE_B, LANES]
    z0 = jnp.maximum(b[:, 0:np_], 0.0)                     # g(0): zero input => skip terms are just biases

    for k in range(nhidden):
        u_k = jnp.maximum(u_ref[k], 0.0).astype(jnp.bfloat16)      # relu of NonNegativeLinear weight
        px_k = px_all[:, (k + 1) * np_:(k + 2) * np_]
        b_k = b[:, (k + 1) * np_:(k + 2) * np_]
        z = jnp.maximum(
            jnp.dot(z.astype(jnp.bfloat16), u_k, preferred_element_type=jnp.float32) + px_k, 0.0)
        z0 = jnp.maximum(
            jnp.dot(z0.astype(jnp.bfloat16), u_k, preferred_element_type=jnp.float32) + b_k, 0.0)

    # PosDef head (all f32 elementwise).
    shift = _rehu(z - z0, d)
    quad_psd = eps * jnp.sum(x_f32 * x_f32, axis=1, keepdims=True)
    zout = shift + quad_psd
    if maxval is not None:
        zout = zout - jnp.maximum(zout - maxval, 0.0)       # == min(zout, maxval)
    out_ref[...] = zout.astype(out_ref.dtype)


def posdef_forward(x, in_W, in_b, layer_params, *, eps=0.01, d=1.0, maxval=None):
    """
    x            : [B, insize]
    in_W, in_b   : [insize, h0], [1, h0]
    layer_params : list of (W_k [insize, s_{k+1}], b_k [1, s_{k+1}], U_k [s_k, s_{k+1}])
    returns      : [B, out_features] with out_features = layer_params[-1][0].shape[1]
    """
    B, insize = x.shape
    nhidden = len(layer_params)
    out_features = layer_params[-1][0].shape[1]

    # ---- pack parameters into 3 slabs (fewer DMAs, lane-aligned per-layer slices) ----
    def pad_cols(a):
        return jnp.pad(a, ((0, 0), (0, LANES - a.shape[1])))

    W_cat = jnp.concatenate([pad_cols(in_W)] + [pad_cols(W) for (W, _, _) in layer_params], axis=1)
    b_cat = jnp.concatenate([pad_cols(in_b)] + [pad_cols(b) for (_, b, _) in layer_params], axis=1)
    U_stack = jnp.stack(
        [jnp.pad(U, ((0, LANES - U.shape[0]), (0, LANES - U.shape[1]))) for (_, _, U) in layer_params],
        axis=0)

    # ---- batch tiling: weights resident, x/out pipelined over the batch ----
    tile_b = min(512, _round_up(B, 8))        # f32 sublane multiple; cap keeps VMEM << 32 MiB on v7x
    b_pad = _round_up(B, tile_b)
    x_p = jnp.pad(x, ((0, b_pad - B), (0, 0))) if b_pad != B else x

    kernel = functools.partial(
        posdef_kernel,
        nhidden=nhidden,
        eps=float(eps),
        d=float(d),
        maxval=None if maxval is None else float(maxval),
    )

    out = pl.pallas_call(
        kernel,
        out_shape=jax.ShapeDtypeStruct((b_pad, LANES), x.dtype),     # lane-dense output slab
        grid=(b_pad // tile_b,),
        in_specs=[
            pl.BlockSpec((tile_b, insize), lambda i: (i, 0)),                    # x: tiled over batch
            pl.BlockSpec((insize, (nhidden + 1) * LANES), lambda i: (0, 0)),     # W_cat: resident
            pl.BlockSpec((1, (nhidden + 1) * LANES), lambda i: (0, 0)),          # b_cat: resident
            pl.BlockSpec((nhidden, LANES, LANES), lambda i: (0, 0, 0)),          # U_stack: resident
        ],
        out_specs=pl.BlockSpec((tile_b, LANES), lambda i: (i, 0)),
        compiler_params=pltpu.CompilerParams(
            dimension_semantics=("parallel",)),   # v7x: both TensorCores take half the batch
    )(x_p, W_cat, b_cat, U_stack)

    return out[:B, :out_features]


def reference_posdef(x, in_W, in_b, layer_params, *, eps=0.01, d=1.0, maxval=None, mxu_bf16=False):
    """Pure-JAX reference. mxu_bf16=True mimics the kernel's bf16-operand / f32-accumulate matmuls."""
    def mm(a, w):
        if mxu_bf16:
            a = a.astype(jnp.bfloat16)
            w = w.astype(jnp.bfloat16)
        return jnp.dot(a, w, preferred_element_type=jnp.float32)

    def g(xi):
        z = jax.nn.relu(mm(xi, in_W) + in_b)
        for (W, b, U) in layer_params:
            z = jax.nn.relu(mm(z, jax.nn.relu(U)) + (mm(xi, W) + b))
        return z

    gx = g(x)
    g0 = g(jnp.zeros((1, x.shape[1]), x.dtype))
    z = _rehu(gx - g0, d) + eps * jnp.sum(x * x, axis=1, keepdims=True)
    if maxval is not None:
        z = z - jax.nn.relu(z - maxval)
    return z


if __name__ == "__main__":
    # Small, module-consistent shapes: insize=16, hsizes=[32, 32], scalar Lyapunov output, batch=8.
    batch, insize, out_features = 8, 16, 1
    hsizes = [32, 32]
    nhidden = len(hsizes)
    sizes = hsizes + [out_features]

    key = jax.random.PRNGKey(0)
    keys = jax.random.split(key, 3 + 3 * nhidden)

    x = jax.random.normal(keys[0], (batch, insize), dtype=jnp.float32)
    in_W = jax.random.normal(keys[1], (insize, hsizes[0]), dtype=jnp.float32) * 0.1
    in_b = jax.random.normal(keys[2], (1, hsizes[0]), dtype=jnp.float32) * 0.1

    layer_params = []
    for k in range(nhidden):
        W = jax.random.normal(keys[3 + 3 * k], (insize, sizes[k + 1]), dtype=jnp.float32) * 0.1
        b = jax.random.normal(keys[4 + 3 * k], (1, sizes[k + 1]), dtype=jnp.float32) * 0.1
        U = jnp.abs(jax.random.normal(keys[5 + 3 * k], (sizes[k], sizes[k + 1]), dtype=jnp.float32)) * 0.1
        layer_params.append((W, b, U))

    eps, d = 0.01, 1.0
    for mv in (None, 0.8):    # exercise both max=None and the max-clamp path
        out = posdef_forward(x, in_W, in_b, layer_params, eps=eps, d=d, maxval=mv)
        out = jax.block_until_ready(out)
        assert out.shape == (batch, out_features)

        # Tight check vs a reference with the same numerics (bf16 matmul operands, f32 accumulate).
        ref_bf16 = reference_posdef(x, in_W, in_b, layer_params, eps=eps, d=d, maxval=mv, mxu_bf16=True)
        assert jnp.allclose(out, ref_bf16, atol=1e-4, rtol=1e-4), "mismatch vs bf16-operand reference"

        # Sanity check vs the exact f32 PyTorch-equivalent semantics (bf16 operand rounding only).
        ref_f32 = reference_posdef(x, in_W, in_b, layer_params, eps=eps, d=d, maxval=mv, mxu_bf16=False)
        assert jnp.allclose(out, ref_f32, atol=2e-2, rtol=2e-2), "mismatch vs f32 reference"

    print("KERNEL_OK")
</pallas_src>

<mosaic_0001>
module attributes {stable_mosaic.version = 11 : i64} {
  func.func @posdef_kernel(%arg0: i32, %arg1: memref<8x16xf32, #tpu.memory_space<vmem>>, %arg2: memref<16x384xf32, #tpu.memory_space<vmem>>, %arg3: memref<1x384xf32, #tpu.memory_space<vmem>>, %arg4: memref<2x128x128xf32, #tpu.memory_space<vmem>>, %arg5: memref<8x128xf32, #tpu.memory_space<vmem>>) attributes {dimension_semantics = [#tpu.dimension_semantics<parallel>], iteration_bounds = array<i64: 1>, scalar_prefetch = 0 : i64, scratch_operands = 0 : i64, tpu.core_type = #tpu.core_type<tc>, window_params = [{transform_indices = @transform_0, window_bounds = array<i64: 8, 16>}, {pipeline_mode = #tpu.pipeline_mode<synchronous>, transform_indices = @transform_1, window_bounds = array<i64: 16, 384>}, {pipeline_mode = #tpu.pipeline_mode<synchronous>, transform_indices = @transform_2, window_bounds = array<i64: 1, 384>}, {pipeline_mode = #tpu.pipeline_mode<synchronous>, transform_indices = @transform_3, window_bounds = array<i64: 2, 128, 128>}, {transform_indices = @transform_4, window_bounds = array<i64: 8, 128>}]} {
    %c0 = arith.constant 0 : index
    %c0_0 = arith.constant 0 : index
    %0 = vector.load %arg1[%c0, %c0_0] : memref<8x16xf32, #tpu.memory_space<vmem>>, vector<8x16xf32>
    %1 = arith.truncf %0 : vector<8x16xf32> to vector<8x16xbf16>
    %c0_1 = arith.constant 0 : index
    %c0_2 = arith.constant 0 : index
    %2 = vector.load %arg2[%c0_1, %c0_2] : memref<16x384xf32, #tpu.memory_space<vmem>>, vector<16x384xf32>
    %3 = arith.truncf %2 : vector<16x384xf32> to vector<16x384xbf16>
    %c0_3 = arith.constant 0 : index
    %c0_4 = arith.constant 0 : index
    %4 = vector.load %arg3[%c0_3, %c0_4] : memref<1x384xf32, #tpu.memory_space<vmem>>, vector<1x384xf32>
    %cst = arith.constant dense<0.000000e+00> : vector<8x384xf32>
    %5 = tpu.matmul %1, %3, %cst {dimension_numbers = #tpu.dot_dimension_numbers<[1], [0], [0], [1], [0, 0, 1, 1], [], []>} : vector<8x16xbf16>, vector<16x384xbf16>, vector<8x384xf32> -> vector<8x384xf32>
    %6 = vector.broadcast %4 : vector<1x384xf32> to vector<8x384xf32>
    %7 = arith.addf %5, %6 : vector<8x384xf32>
    %8 = vector.extract_strided_slice %7 {offsets = [0, 0], sizes = [8, 128], strides = [1, 1]} : vector<8x384xf32> to vector<8x128xf32>
    %cst_5 = arith.constant 0.000000e+00 : f32
    %9 = vector.broadcast %cst_5 : f32 to vector<8x128xf32>
    %10 = arith.maximumf %8, %9 : vector<8x128xf32>
    %11 = vector.extract_strided_slice %4 {offsets = [0, 0], sizes = [1, 128], strides = [1, 1]} : vector<1x384xf32> to vector<1x128xf32>
    %cst_6 = arith.constant 0.000000e+00 : f32
    %12 = vector.broadcast %cst_6 : f32 to vector<1x128xf32>
    %13 = arith.maximumf %11, %12 : vector<1x128xf32>
    %c0_7 = arith.constant 0 : index
    %c0_8 = arith.constant 0 : index
    %c0_9 = arith.constant 0 : index
    %14 = vector.load %arg4[%c0_7, %c0_8, %c0_9] : memref<2x128x128xf32, #tpu.memory_space<vmem>>, vector<1x128x128xf32>
    %15 = vector.shape_cast %14 : vector<1x128x128xf32> to vector<128x128xf32>
    %cst_10 = arith.constant 0.000000e+00 : f32
    %16 = vector.broadcast %cst_10 : f32 to vector<128x128xf32>
    %17 = arith.maximumf %15, %16 : vector<128x128xf32>
    %18 = arith.truncf %17 : vector<128x128xf32> to vector<128x128xbf16>
    %19 = vector.extract_strided_slice %7 {offsets = [0, 128], sizes = [8, 128], strides = [1, 1]} : vector<8x384xf32> to vector<8x128xf32>
    %20 = vector.extract_strided_slice %4 {offsets = [0, 128], sizes = [1, 128], strides = [1, 1]} : vector<1x384xf32> to vector<1x128xf32>
    %21 = arith.truncf %10 : vector<8x128xf32> to vector<8x128xbf16>
    %cst_11 = arith.constant dense<0.000000e+00> : vector<8x128xf32>
    %22 = tpu.matmul %21, %18, %cst_11 {dimension_numbers = #tpu.dot_dimension_numbers<[1], [0], [0], [1], [0, 0, 1, 1], [], []>} : vector<8x128xbf16>, vector<128x128xbf16>, vector<8x128xf32> -> vector<8x128xf32>
    %23 = arith.addf %22, %19 : vector<8x128xf32>
    %cst_12 = arith.constant 0.000000e+00 : f32
    %24 = vector.broadcast %cst_12 : f32 to vector<8x128xf32>
    %25 = arith.maximumf %23, %24 : vector<8x128xf32>
    %26 = arith.truncf %13 : vector<1x128xf32> to vector<1x128xbf16>
    %cst_13 = arith.constant dense<0.000000e+00> : vector<1x128xf32>
    %27 = tpu.matmul %26, %18, %cst_13 {dimension_numbers = #tpu.dot_dimension_numbers<[1], [0], [0], [1], [0, 0, 1, 1], [], []>} : vector<1x128xbf16>, vector<128x128xbf16>, vector<1x128xf32> -> vector<1x128xf32>
    %28 = arith.addf %27, %20 : vector<1x128xf32>
    %cst_14 = arith.constant 0.000000e+00 : f32
    %29 = vector.broadcast %cst_14 : f32 to vector<1x128xf32>
    %30 = arith.maximumf %28, %29 : vector<1x128xf32>
    %c1 = arith.constant 1 : index
    %c0_15 = arith.constant 0 : index
    %c0_16 = arith.constant 0 : index
    %31 = vector.load %arg4[%c1, %c0_15, %c0_16] : memref<2x128x128xf32, #tpu.memory_space<vmem>>, vector<1x128x128xf32>
    %32 = vector.shape_cast %31 : vector<1x128x128xf32> to vector<128x128xf32>
    %cst_17 = arith.constant 0.000000e+00 : f32
    %33 = vector.broadcast %cst_17 : f32 to vector<128x128xf32>
    %34 = arith.maximumf %32, %33 : vector<128x128xf32>
    %35 = arith.truncf %34 : vector<128x128xf32> to vector<128x128xbf16>
    %36 = vector.extract_strided_slice %7 {offsets = [0, 256], sizes = [8, 128], strides = [1, 1]} : vector<8x384xf32> to vector<8x128xf32>
    %37 = vector.extract_strided_slice %4 {offsets = [0, 256], sizes = [1, 128], strides = [1, 1]} : vector<1x384xf32> to vector<1x128xf32>
    %38 = arith.truncf %25 : vector<8x128xf32> to vector<8x128xbf16>
    %cst_18 = arith.constant dense<0.000000e+00> : vector<8x128xf32>
    %39 = tpu.matmul %38, %35, %cst_18 {dimension_numbers = #tpu.dot_dimension_numbers<[1], [0], [0], [1], [0, 0, 1, 1], [], []>} : vector<8x128xbf16>, vector<128x128xbf16>, vector<8x128xf32> -> vector<8x128xf32>
    %40 = arith.addf %39, %36 : vector<8x128xf32>
    %cst_19 = arith.constant 0.000000e+00 : f32
    %41 = vector.broadcast %cst_19 : f32 to vector<8x128xf32>
    %42 = arith.maximumf %40, %41 : vector<8x128xf32>
    %43 = arith.truncf %30 : vector<1x128xf32> to vector<1x128xbf16>
    %cst_20 = arith.constant dense<0.000000e+00> : vector<1x128xf32>
    %44 = tpu.matmul %43, %35, %cst_20 {dimension_numbers = #tpu.dot_dimension_numbers<[1], [0], [0], [1], [0, 0, 1, 1], [], []>} : vector<1x128xbf16>, vector<128x128xbf16>, vector<1x128xf32> -> vector<1x128xf32>
    %45 = arith.addf %44, %37 : vector<1x128xf32>
    %cst_21 = arith.constant 0.000000e+00 : f32
    %46 = vector.broadcast %cst_21 : f32 to vector<1x128xf32>
    %47 = arith.maximumf %45, %46 : vector<1x128xf32>
    %48 = vector.broadcast %47 : vector<1x128xf32> to vector<8x128xf32>
    %49 = arith.subf %42, %48 : vector<8x128xf32>
    %cst_22 = arith.constant 5.000000e-01 : f32
    %50 = vector.broadcast %cst_22 : f32 to vector<8x128xf32>
    %51 = arith.mulf %50, %49 : vector<8x128xf32>
    %52 = math.absf %49 : vector<8x128xf32>
    %53 = arith.mulf %51, %52 : vector<8x128xf32>
    %cst_23 = arith.constant 0.000000e+00 : f32
    %cst_24 = arith.constant 5.000000e-01 : f32
    %54 = vector.broadcast %cst_23 : f32 to vector<8x128xf32>
    %55 = arith.maximumf %54, %53 : vector<8x128xf32>
    %56 = vector.broadcast %cst_24 : f32 to vector<8x128xf32>
    %57 = arith.minimumf %56, %55 : vector<8x128xf32>
    %cst_25 = arith.constant 5.000000e-01 : f32
    %58 = vector.broadcast %cst_25 : f32 to vector<8x128xf32>
    %59 = arith.subf %49, %58 : vector<8x128xf32>
    %60 = arith.maximumf %57, %59 : vector<8x128xf32>
    %61 = arith.mulf %0, %0 : vector<8x16xf32>
    %cst_26 = arith.constant dense<0.000000e+00> : vector<8xf32>
    %62 = vector.multi_reduction <add>, %61, %cst_26 [1] : vector<8x16xf32> to vector<8xf32>
    %63 = vector.shape_cast %62 : vector<8xf32> to vector<8x1xf32>
    %cst_27 = arith.constant 0.00999999977 : f32
    %64 = vector.broadcast %cst_27 : f32 to vector<8x1xf32>
    %65 = arith.mulf %64, %63 : vector<8x1xf32>
    %66 = vector.broadcast %65 : vector<8x1xf32> to vector<8x128xf32>
    %67 = arith.addf %60, %66 : vector<8x128xf32>
    %c0_28 = arith.constant 0 : index
    %c0_29 = arith.constant 0 : index
    %68 = vector.load %arg5[%c0_28, %c0_29] : memref<8x128xf32, #tpu.memory_space<vmem>>, vector<8x128xf32>
    tpu.vector_store %arg5[%c0_28, %c0_29], %67 {strides = array<i32>} : memref<8x128xf32, #tpu.memory_space<vmem>>, vector<8x128xf32>,
    return
  }
  func.func @transform_0(%arg0: i32) -> (i32, i32) {
    %c0_i32 = arith.constant 0 : i32
    %c0_i32_0 = arith.constant 0 : i32
    return %arg0, %c0_i32 : i32, i32
  }
  func.func @transform_1(%arg0: i32) -> (i32, i32) {
    %c0_i32 = arith.constant 0 : i32
    %c0_i32_0 = arith.constant 0 : i32
    %c0_i32_1 = arith.constant 0 : i32
    return %c0_i32, %c0_i32_0 : i32, i32
  }
  func.func @transform_2(%arg0: i32) -> (i32, i32) {
    %c0_i32 = arith.constant 0 : i32
    %c0_i32_0 = arith.constant 0 : i32
    %c0_i32_1 = arith.constant 0 : i32
    return %c0_i32, %c0_i32_0 : i32, i32
  }
  func.func @transform_3(%arg0: i32) -> (i32, i32, i32) {
    %c0_i32 = arith.constant 0 : i32
    %c0_i32_0 = arith.constant 0 : i32
    %c0_i32_1 = arith.constant 0 : i32
    %c0_i32_2 = arith.constant 0 : i32
    return %c0_i32, %c0_i32_0, %c0_i32_1 : i32, i32, i32
  }
  func.func @transform_4(%arg0: i32) -> (i32, i32) {
    %c0_i32 = arith.constant 0 : i32
    %c0_i32_0 = arith.constant 0 : i32
    return %arg0, %c0_i32 : i32, i32
  }
}

</mosaic_0001>

<llo_original>
// kernel: tpu_custom_call.1
$region0: #{tpu_custom_call.1}
  #allocation0 [shape = 'u32[]', space=smem, size = 0x4, offset = 0x4, fixed_abs, tag = 'smem constant byte address 0x4 - core index']
  #allocation1 [shape = 'u32[144,128]{1,0:T(1,128)}', space=vmem, size = 0x12000, scoped, tag = 'internal scratch']
  %s0 = inlined_call_operand.hbm [shape: f32[8,16], index: 0, kind: input, shape index: {}]
  %s1 = inlined_call_operand.hbm [shape: f32[16,384], index: 1, kind: input, shape index: {}]
  %s2 = inlined_call_operand.vmem [shape: f32[1,384], index: 2, kind: input, shape index: {}]
  %s3 = inlined_call_operand.hbm [shape: f32[2,128,128], index: 3, kind: input, shape index: {}]
  %s4 = inlined_call_operand.hbm [shape: f32[8,128], index: 4, kind: output, shape index: {}]
  %s5 = sld [smem:[#allocation0]]
  $region38: #{tpu_custom_call.1} parent=0
    _
  %s7 = ssub.s32 1, %s5
  %s8 = scalar_select 0, %s7, %s5
  $region1: #{tpu_custom_call.1} parent=0
    #allocation2 [shape = 'u8[4096]{0}', space=vmem, size = 0x1000, scoped, tag = 'input window, operand 0, single buffered']
    #allocation3 [shape = 's32[1]{0}', space=sflag, size = 0x4, scoped, tag = 'scoped memory for tpu_custom_call.1']
    #allocation4 [shape = 's32[1]{0}', space=sflag, size = 0x4, scoped, tag = 'scoped memory for tpu_custom_call.1']
    #allocation5 [shape = 'u8[24576]{0}', space=vmem, size = 0x6000, scoped, tag = 'input window, operand 1, single buffered']
    #allocation6 [shape = 's32[1]{0}', space=sflag, size = 0x4, scoped, tag = 'scoped memory for tpu_custom_call.1']
    #allocation7 [shape = 'u8[131072]{0}', space=vmem, size = 0x20000, scoped, tag = 'input window, operand 3, single buffered']
    #allocation8 [shape = 'u8[4096]{0}', space=vmem, size = 0x1000, scoped, tag = 'output window, operand 0, single buffered']
    %9 = vsyncpa [#allocation3], 0
    %10 = vsyncpa [#allocation6], 0
    %11 = vsyncpa [#allocation4], 0
    // Predicated region
    $region2: #{tpu_custom_call.1} parent=1 // pred_check
      _
    $region3: #{tpu_custom_call.1} parent=1 // pred_check_branch
      %13 = sbr.rel (0) target = $region5
    $region4: #{tpu_custom_call.1} parent=1 // pred_region
      %s15 = ssub.s32 128, 128
      %16 = vsyncadd [#allocation3], %s15
      %s18 = sshll.u32 [#allocation2], 4
      %s19 = int_to_ptr.vmem [resolvable:$true] %s18
      %21 = dma.hbm_to_vmem [thread:$0]  %s0, 128, %s19, [#allocation3]
    $region5: #{tpu_custom_call.1} parent=1 // pred_fallthru
      _
    // Predicated region
    $region6: #{tpu_custom_call.1} parent=1 // pred_check
      _
    $region7: #{tpu_custom_call.1} parent=1 // pred_check_branch
      %23 = sbr.rel (0) target = $region9
    $region8: #{tpu_custom_call.1} parent=1 // pred_region
      %s25 = ssub.s32 768, 768
      %26 = vsyncadd [#allocation6], %s25
      %s27 = sshll.u32 [#allocation5], 4
      %s28 = int_to_ptr.vmem [resolvable:$true] %s27
      %33 = dma.hbm_to_vmem [thread:$0]  %s1, 768, %s28, [#allocation6], 384, 384, 24
    $region9: #{tpu_custom_call.1} parent=1 // pred_fallthru
      _
    // Predicated region
    $region10: #{tpu_custom_call.1} parent=1 // pred_check
      _
    $region11: #{tpu_custom_call.1} parent=1 // pred_check_branch
      %35 = sbr.rel (0) target = $region13
    $region12: #{tpu_custom_call.1} parent=1 // pred_region
      _
    $region13: #{tpu_custom_call.1} parent=1 // pred_fallthru
      _
    // Predicated region
    $region14: #{tpu_custom_call.1} parent=1 // pred_check
      _
    $region15: #{tpu_custom_call.1} parent=1 // pred_check_branch
      %37 = sbr.rel (0) target = $region17
    $region16: #{tpu_custom_call.1} parent=1 // pred_region
      %s39 = ssub.s32 4096, 4096
      %40 = vsyncadd [#allocation6], %s39
      %s41 = sshll.u32 [#allocation7], 4
      %s42 = int_to_ptr.vmem [resolvable:$true] %s41
      %47 = dma.hbm_to_vmem [thread:$0]  %s3, 4096, %s42, [#allocation6], 128, 128, 8
    $region17: #{tpu_custom_call.1} parent=1 // pred_fallthru
      _
    // Predicated region
    $region18: #{tpu_custom_call.1} parent=1 // pred_check
      _
    $region19: #{tpu_custom_call.1} parent=1 // pred_check_branch
      %49 = sbr.rel (0) target = $region21
    $region20: #{tpu_custom_call.1} parent=1 // pred_region
      %50 = dma.done [#allocation3], 128
    $region21: #{tpu_custom_call.1} parent=1 // pred_fallthru
      _
    // Predicated region
    $region22: #{tpu_custom_call.1} parent=1 // pred_check
      _
    $region23: #{tpu_custom_call.1} parent=1 // pred_check_branch
      %52 = sbr.rel (0) target = $region25
    $region24: #{tpu_custom_call.1} parent=1 // pred_region
      %53 = dma.done [#allocation6], 768
    $region25: #{tpu_custom_call.1} parent=1 // pred_fallthru
      _
    // Predicated region
    $region26: #{tpu_custom_call.1} parent=1 // pred_check
      _
    $region27: #{tpu_custom_call.1} parent=1 // pred_check_branch
      %55 = sbr.rel (0) target = $region29
    $region28: #{tpu_custom_call.1} parent=1 // pred_region
      %56 = dma.done [#allocation6], 4096
    $region29: #{tpu_custom_call.1} parent=1 // pred_fallthru
      _
    %v58 = vld [vmem:[#allocation2] sm:$0xff]
    %v59 = vpack.c.bf16 %v58, %v58
    %v60 = vld [vmem:[#allocation5] sm:$0xff]
    %v61 = vld [vmem:[#allocation5 + $0x8] sm:$0xff]
    %v62 = vld [vmem:[#allocation5 + $0x10] sm:$0xff]
    %v63 = vld [vmem:[#allocation5 + $0x18] sm:$0xff]
    %v64 = vld [vmem:[#allocation5 + $0x20] sm:$0xff]
    %v65 = vld [vmem:[#allocation5 + $0x28] sm:$0xff]
    %v66 = vpack.c.bf16 %v63, %v60
    %v67 = vpack.c.bf16 %v64, %v61
    %v68 = vpack.c.bf16 %v65, %v62
    %v69 = vld [vmem:[%s2] sm:$0x7]
    %v71 = vlaneseq
    %v72 = vshrl.u32 %v71, 7
    %v73 = vsub.s32 0, %v72
    %v74 = vrot.slane %v69, %v73
    %v75 = vlaneseq
    %v76 = vshrl.u32 %v75, 7
    %v77 = vsub.s32 1, %v76
    %v78 = vrot.slane %v69, %v77
    %v79 = vlaneseq
    %v80 = vshrl.u32 %v79, 7
    %v81 = vsub.s32 2, %v80
    %v82 = vrot.slane %v69, %v81
    %vm86 = vcmask 130048
    %v88 = vsel %vm86, %v59, 0
    %90 = vmatprep.subr.bf16.mxu0 0
    %91 = vmatpush1.bf16.msra.mxu0 0
    %92 = vmatprep.subr.bf16.mxu0 0
    %93 = vmatpush1.bf16.msra.mxu0 0
    %94 = vmatprep.subr.bf16.mxu0 0
    %95 = vmatpush1.bf16.msra.mxu0 0
    %96 = vmatprep.subr.bf16.mxu0 0
    %97 = vmatpush1.bf16.msra.mxu0 0
    %98 = vmatprep.subr.bf16.mxu0 0
    %99 = vmatpush1.bf16.msra.mxu0 0
    %100 = vmatprep.subr.bf16.mxu0 0
    %101 = vmatpush1.bf16.msra.mxu0 0
    %102 = vmatprep.subr.bf16.mxu0 0
    %103 = vmatpush1.bf16.msra.mxu0 0
    %104 = vmatprep.subr.bf16.mxu0 %v67
    %105 = vmatpush1.bf16.msra.mxu0 %v66
    %106 = vmatprep.subr.bf16.mxu0 0
    %107 = vmatpush2.bf16.msra.mxu0 0
    %108 = vmatprep.subr.bf16.mxu0 0
    %109 = vmatpush2.bf16.msra.mxu0 0
    %110 = vmatprep.subr.bf16.mxu0 0
    %111 = vmatpush2.bf16.msra.mxu0 0
    %112 = vmatprep.subr.bf16.mxu0 0
    %113 = vmatpush2.bf16.msra.mxu0 0
    %114 = vmatprep.subr.bf16.mxu0 0
    %115 = vmatpush2.bf16.msra.mxu0 0
    %116 = vmatprep.subr.bf16.mxu0 0
    %117 = vmatpush2.bf16.msra.mxu0 0
    %118 = vmatprep.subr.bf16.mxu0 0
    %119 = vmatpush2.bf16.msra.mxu0 0
    %120 = vmatprep.subr.bf16.mxu0 0
    %121 = vmatpush2.bf16.msra.mxu0 0
    %122 = vmatprep.mubr.bf16.mxu0 0
    %123 = vmatmul.mubr.bf16.gmra.mxu0 %v88
    %v124 = vpop.f32.mrf.mxu0
    %v125 = vadd.f32 %v74, %v124
    %v126 = vpop.f32.mrf.mxu0
    %v127 = vadd.f32 %v78, %v126
    %v128 = vpop.f32.mrf.mxu0
    %v129 = vpop.f32.mrf.mxu0
    %130 = vdwg.mxu0
    %131 = vmatprep.subr.bf16.mxu0 0
    %132 = vmatpush1.bf16.msra.mxu0 0
    %133 = vmatprep.subr.bf16.mxu0 0
    %134 = vmatpush1.bf16.msra.mxu0 0
    %135 = vmatprep.subr.bf16.mxu0 0
    %136 = vmatpush1.bf16.msra.mxu0 0
    %137 = vmatprep.subr.bf16.mxu0 0
    %138 = vmatpush1.bf16.msra.mxu0 0
    %139 = vmatprep.subr.bf16.mxu0 0
    %140 = vmatpush1.bf16.msra.mxu0 0
    %141 = vmatprep.subr.bf16.mxu0 0
    %142 = vmatpush1.bf16.msra.mxu0 0
    %143 = vmatprep.subr.bf16.mxu0 0
    %144 = vmatpush1.bf16.msra.mxu0 0
    %145 = vmatprep.subr.bf16.mxu0 0
    %146 = vmatpush1.bf16.msra.mxu0 %v68
    %147 = vmatprep.subr.bf16.mxu0 0
    %148 = vmatpush2.bf16.msra.mxu0 0
    %149 = vmatprep.subr.bf16.mxu0 0
    %150 = vmatpush2.bf16.msra.mxu0 0
    %151 = vmatprep.subr.bf16.mxu0 0
    %152 = vmatpush2.bf16.msra.mxu0 0
    %153 = vmatprep.subr.bf16.mxu0 0
    %154 = vmatpush2.bf16.msra.mxu0 0
    %155 = vmatprep.subr.bf16.mxu0 0
    %156 = vmatpush2.bf16.msra.mxu0 0
    %157 = vmatprep.subr.bf16.mxu0 0
    %158 = vmatpush2.bf16.msra.mxu0 0
    %159 = vmatprep.subr.bf16.mxu0 0
    %160 = vmatpush2.bf16.msra.mxu0 0
    %161 = vmatprep.subr.bf16.mxu0 0
    %162 = vmatpush2.bf16.msra.mxu0 0
    %163 = vmatprep.mubr.bf16.mxu0 0
    %164 = vmatmul.mubr.bf16.gmra.mxu0 %v88
    %v165 = vpop.f32.mrf.mxu0
    %v166 = vadd.f32 %v82, %v165
    %v167 = vpop.f32.mrf.mxu0
    %v168 = vpop.f32.mrf.mxu0
    %v169 = vpop.f32.mrf.mxu0
    %170 = vdwg.mxu0
    %v171 = vmax.f32 %v125, 0.0
    %v172 = vmax.f32 %v69, 0.0
    %v173 = vld [vmem:[#allocation7] sm:$0xff]
    %v174 = vld [vmem:[#allocation7 + $0x8] sm:$0xff]
    %v175 = vld [vmem:[#allocation7 + $0x10] sm:$0xff]
    %v176 = vld [vmem:[#allocation7 + $0x18] sm:$0xff]
    %v177 = vld [vmem:[#allocation7 + $0x20] sm:$0xff]
    %v178 = vld [vmem:[#allocation7 + $0x28] sm:$0xff]
    %v179 = vld [vmem:[#allocation7 + $0x30] sm:$0xff]
    %v180 = vld [vmem:[#allocation7 + $0x38] sm:$0xff]
    %v181 = vld [vmem:[#allocation7 + $0x40] sm:$0xff]
    %v182 = vld [vmem:[#allocation7 + $0x48] sm:$0xff]
    %v183 = vld [vmem:[#allocation7 + $0x50] sm:$0xff]
    %v184 = vld [vmem:[#allocation7 + $0x58] sm:$0xff]
    %v185 = vld [vmem:[#allocation7 + $0x60] sm:$0xff]
    %v186 = vld [vmem:[#allocation7 + $0x68] sm:$0xff]
    %v187 = vld [vmem:[#allocation7 + $0x70] sm:$0xff]
    %v188 = vld [vmem:[#allocation7 + $0x78] sm:$0xff]
    %v189 = vmax.f32 %v173, 0.0
    %v190 = vmax.f32 %v174, 0.0
    %v191 = vmax.f32 %v175, 0.0
    %v192 = vmax.f32 %v176, 0.0
    %v193 = vmax.f32 %v177, 0.0
    %v194 = vmax.f32 %v178, 0.0
    %v195 = vmax.f32 %v179, 0.0
    %v196 = vmax.f32 %v180, 0.0
    %v197 = vmax.f32 %v181, 0.0
    %v198 = vmax.f32 %v182, 0.0
    %v199 = vmax.f32 %v183, 0.0
    %v200 = vmax.f32 %v184, 0.0
    %v201 = vmax.f32 %v185, 0.0
    %v202 = vmax.f32 %v186, 0.0
    %v203 = vmax.f32 %v187, 0.0
    %v204 = vmax.f32 %v188, 0.0
    %v205 = vpack.c.bf16 %v190, %v189
    %v206 = vpack.c.bf16 %v192, %v191
    %v207 = vpack.c.bf16 %v194, %v193
    %v208 = vpack.c.bf16 %v196, %v195
    %v209 = vpack.c.bf16 %v198, %v197
    %v210 = vpack.c.bf16 %v200, %v199
    %v211 = vpack.c.bf16 %v202, %v201
    %v212 = vpack.c.bf16 %v204, %v203
    %v213 = vpack.c.bf16 %v171, %v171
    %214 = vmatprep.subr.bf16.mxu0 0
    %215 = vmatpush1.bf16.msra.mxu0 %v212
    %216 = vmatprep.subr.bf16.mxu0 0
    %217 = vmatpush1.bf16.msra.mxu0 %v211
    %218 = vmatprep.subr.bf16.mxu0 0
    %219 = vmatpush1.bf16.msra.mxu0 %v210
    %220 = vmatprep.subr.bf16.mxu0 0
    %221 = vmatpush1.bf16.msra.mxu0 %v209
    %222 = vmatprep.subr.bf16.mxu0 0
    %223 = vmatpush1.bf16.msra.mxu0 %v208
    %224 = vmatprep.subr.bf16.mxu0 0
    %225 = vmatpush1.bf16.msra.mxu0 %v207
    %226 = vmatprep.subr.bf16.mxu0 0
    %227 = vmatpush1.bf16.msra.mxu0 %v206
    %228 = vmatprep.subr.bf16.mxu0 0
    %229 = vmatpush1.bf16.msra.mxu0 %v205
    %230 = vmatprep.subr.bf16.mxu0 0
    %231 = vmatpush2.bf16.msra.mxu0 0
    %232 = vmatprep.subr.bf16.mxu0 0
    %233 = vmatpush2.bf16.msra.mxu0 0
    %234 = vmatprep.subr.bf16.mxu0 0
    %235 = vmatpush2.bf16.msra.mxu0 0
    %236 = vmatprep.subr.bf16.mxu0 0
    %237 = vmatpush2.bf16.msra.mxu0 0
    %238 = vmatprep.subr.bf16.mxu0 0
    %239 = vmatpush2.bf16.msra.mxu0 0
    %240 = vmatprep.subr.bf16.mxu0 0
    %241 = vmatpush2.bf16.msra.mxu0 0
    %242 = vmatprep.subr.bf16.mxu0 0
    %243 = vmatpush2.bf16.msra.mxu0 0
    %244 = vmatprep.subr.bf16.mxu0 0
    %245 = vmatpush2.bf16.msra.mxu0 0
    %246 = vmatprep.mubr.bf16.mxu0 0
    %247 = vmatmul.mubr.bf16.gmra.mxu0 %v213
    %v248 = vpop.f32.mrf.mxu0
    %v249 = vadd.f32 %v127, %v248
    %v250 = vpop.f32.mrf.mxu0
    %v251 = vpop.f32.mrf.mxu0
    %v252 = vpop.f32.mrf.mxu0
    %253 = vdwg.mxu0
    %v254 = vmax.f32 %v249, 0.0
    %v255 = vpack.c.bf16 %v172, %v172
    %256 = vmatprep.subr.bf16.mxu0 0
    %257 = vmatpush1.bf16.msra.mxu0 %v212
    %258 = vmatprep.subr.bf16.mxu0 0
    %259 = vmatpush1.bf16.msra.mxu0 %v211
    %260 = vmatprep.subr.bf16.mxu0 0
    %261 = vmatpush1.bf16.msra.mxu0 %v210
    %262 = vmatprep.subr.bf16.mxu0 0
    %263 = vmatpush1.bf16.msra.mxu0 %v209
    %264 = vmatprep.subr.bf16.mxu0 0
    %265 = vmatpush1.bf16.msra.mxu0 %v208
    %266 = vmatprep.subr.bf16.mxu0 0
    %267 = vmatpush1.bf16.msra.mxu0 %v207
    %268 = vmatprep.subr.bf16.mxu0 0
    %269 = vmatpush1.bf16.msra.mxu0 %v206
    %270 = vmatprep.subr.bf16.mxu0 0
    %271 = vmatpush1.bf16.msra.mxu0 %v205
    %272 = vmatprep.subr.bf16.mxu0 0
    %273 = vmatpush2.bf16.msra.mxu0 0
    %274 = vmatprep.subr.bf16.mxu0 0
    %275 = vmatpush2.bf16.msra.mxu0 0
    %276 = vmatprep.subr.bf16.mxu0 0
    %277 = vmatpush2.bf16.msra.mxu0 0
    %278 = vmatprep.subr.bf16.mxu0 0
    %279 = vmatpush2.bf16.msra.mxu0 0
    %280 = vmatprep.subr.bf16.mxu0 0
    %281 = vmatpush2.bf16.msra.mxu0 0
    %282 = vmatprep.subr.bf16.mxu0 0
    %283 = vmatpush2.bf16.msra.mxu0 0
    %284 = vmatprep.subr.bf16.mxu0 0
    %285 = vmatpush2.bf16.msra.mxu0 0
    %286 = vmatprep.subr.bf16.mxu0 0
    %287 = vmatpush2.bf16.msra.mxu0 0
    %288 = vmatprep.mubr.bf16.mxu0 0
    %289 = vmatmul.mubr.bf16.gmra.mxu0 %v255
    %v290 = vpop.f32.mrf.mxu0
    %v291 = vadd.f32 %v78, %v290
    %v292 = vpop.f32.mrf.mxu0
    %v293 = vpop.f32.mrf.mxu0
    %v294 = vpop.f32.mrf.mxu0
    %295 = vdwg.mxu0
    %v296 = vmax.f32 %v291, 0.0
    %s297 = scalar_lea.vmem [#allocation7], 128
    %v298 = vld [vmem:[%s297] sm:$0xff]
    %v299 = vld [vmem:[%s297 + $0x8] sm:$0xff]
    %v300 = vld [vmem:[%s297 + $0x10] sm:$0xff]
    %v301 = vld [vmem:[%s297 + $0x18] sm:$0xff]
    %v302 = vld [vmem:[%s297 + $0x20] sm:$0xff]
    %v303 = vld [vmem:[%s297 + $0x28] sm:$0xff]
    %v304 = vld [vmem:[%s297 + $0x30] sm:$0xff]
    %v305 = vld [vmem:[%s297 + $0x38] sm:$0xff]
    %v306 = vld [vmem:[%s297 + $0x40] sm:$0xff]
    %v307 = vld [vmem:[%s297 + $0x48] sm:$0xff]
    %v308 = vld [vmem:[%s297 + $0x50] sm:$0xff]
    %v309 = vld [vmem:[%s297 + $0x58] sm:$0xff]
    %v310 = vld [vmem:[%s297 + $0x60] sm:$0xff]
    %v311 = vld [vmem:[%s297 + $0x68] sm:$0xff]
    %v312 = vld [vmem:[%s297 + $0x70] sm:$0xff]
    %v313 = vld [vmem:[%s297 + $0x78] sm:$0xff]
    %v314 = vmax.f32 %v298, 0.0
    %v315 = vmax.f32 %v299, 0.0
    %v316 = vmax.f32 %v300, 0.0
    %v317 = vmax.f32 %v301, 0.0
    %v318 = vmax.f32 %v302, 0.0
    %v319 = vmax.f32 %v303, 0.0
    %v320 = vmax.f32 %v304, 0.0
    %v321 = vmax.f32 %v305, 0.0
    %v322 = vmax.f32 %v306, 0.0
    %v323 = vmax.f32 %v307, 0.0
    %v324 = vmax.f32 %v308, 0.0
    %v325 = vmax.f32 %v309, 0.0
    %v326 = vmax.f32 %v310, 0.0
    %v327 = vmax.f32 %v311, 0.0
    %v328 = vmax.f32 %v312, 0.0
    %v329 = vmax.f32 %v313, 0.0
    %v330 = vpack.c.bf16 %v315, %v314
    %v331 = vpack.c.bf16 %v317, %v316
    %v332 = vpack.c.bf16 %v319, %v318
    %v333 = vpack.c.bf16 %v321, %v320
    %v334 = vpack.c.bf16 %v323, %v322
    %v335 = vpack.c.bf16 %v325, %v324
    %v336 = vpack.c.bf16 %v327, %v326
    %v337 = vpack.c.bf16 %v329, %v328
    %v338 = vpack.c.bf16 %v254, %v254
    %339 = vmatprep.subr.bf16.mxu0 0
    %340 = vmatpush1.bf16.msra.mxu0 %v337
    %341 = vmatprep.subr.bf16.mxu0 0
    %342 = vmatpush1.bf16.msra.mxu0 %v336
    %343 = vmatprep.subr.bf16.mxu0 0
    %344 = vmatpush1.bf16.msra.mxu0 %v335
    %345 = vmatprep.subr.bf16.mxu0 0
    %346 = vmatpush1.bf16.msra.mxu0 %v334
    %347 = vmatprep.subr.bf16.mxu0 0
    %348 = vmatpush1.bf16.msra.mxu0 %v333
    %349 = vmatprep.subr.bf16.mxu0 0
    %350 = vmatpush1.bf16.msra.mxu0 %v332
    %351 = vmatprep.subr.bf16.mxu0 0
    %352 = vmatpush1.bf16.msra.mxu0 %v331
    %353 = vmatprep.subr.bf16.mxu0 0
    %354 = vmatpush1.bf16.msra.mxu0 %v330
    %355 = vmatprep.subr.bf16.mxu0 0
    %356 = vmatpush2.bf16.msra.mxu0 0
    %357 = vmatprep.subr.bf16.mxu0 0
    %358 = vmatpush2.bf16.msra.mxu0 0
    %359 = vmatprep.subr.bf16.mxu0 0
    %360 = vmatpush2.bf16.msra.mxu0 0
    %361 = vmatprep.subr.bf16.mxu0 0
    %362 = vmatpush2.bf16.msra.mxu0 0
    %363 = vmatprep.subr.bf16.mxu0 0
    %364 = vmatpush2.bf16.msra.mxu0 0
    %365 = vmatprep.subr.bf16.mxu0 0
    %366 = vmatpush2.bf16.msra.mxu0 0
    %367 = vmatprep.subr.bf16.mxu0 0
    %368 = vmatpush2.bf16.msra.mxu0 0
    %369 = vmatprep.subr.bf16.mxu0 0
    %370 = vmatpush2.bf16.msra.mxu0 0
    %371 = vmatprep.mubr.bf16.mxu0 0
    %372 = vmatmul.mubr.bf16.gmra.mxu0 %v338
    %v373 = vpop.f32.mrf.mxu0
    %v374 = vadd.f32 %v166, %v373
    %v375 = vpop.f32.mrf.mxu0
    %v376 = vpop.f32.mrf.mxu0
    %v377 = vpop.f32.mrf.mxu0
    %378 = vdwg.mxu0
    %v379 = vmax.f32 %v374, 0.0
    %v380 = vpack.c.bf16 %v296, %v296
    %381 = vmatprep.subr.bf16.mxu0 0
    %382 = vmatpush1.bf16.msra.mxu0 %v337
    %383 = vmatprep.subr.bf16.mxu0 0
    %384 = vmatpush1.bf16.msra.mxu0 %v336
    %385 = vmatprep.subr.bf16.mxu0 0
    %386 = vmatpush1.bf16.msra.mxu0 %v335
    %387 = vmatprep.subr.bf16.mxu0 0
    %388 = vmatpush1.bf16.msra.mxu0 %v334
    %389 = vmatprep.subr.bf16.mxu0 0
    %390 = vmatpush1.bf16.msra.mxu0 %v333
    %391 = vmatprep.subr.bf16.mxu0 0
    %392 = vmatpush1.bf16.msra.mxu0 %v332
    %393 = vmatprep.subr.bf16.mxu0 0
    %394 = vmatpush1.bf16.msra.mxu0 %v331
    %395 = vmatprep.subr.bf16.mxu0 0
    %396 = vmatpush1.bf16.msra.mxu0 %v330
    %397 = vmatprep.subr.bf16.mxu0 0
    %398 = vmatpush2.bf16.msra.mxu0 0
    %399 = vmatprep.subr.bf16.mxu0 0
    %400 = vmatpush2.bf16.msra.mxu0 0
    %401 = vmatprep.subr.bf16.mxu0 0
    %402 = vmatpush2.bf16.msra.mxu0 0
    %403 = vmatprep.subr.bf16.mxu0 0
    %404 = vmatpush2.bf16.msra.mxu0 0
    %405 = vmatprep.subr.bf16.mxu0 0
    %406 = vmatpush2.bf16.msra.mxu0 0
    %407 = vmatprep.subr.bf16.mxu0 0
    %408 = vmatpush2.bf16.msra.mxu0 0
    %409 = vmatprep.subr.bf16.mxu0 0
    %410 = vmatpush2.bf16.msra.mxu0 0
    %411 = vmatprep.subr.bf16.mxu0 0
    %412 = vmatpush2.bf16.msra.mxu0 0
    %413 = vmatprep.mubr.bf16.mxu0 0
    %414 = vmatmul.mubr.bf16.gmra.mxu0 %v380
    %v415 = vpop.f32.mrf.mxu0
    %v416 = vadd.f32 %v82, %v415
    %v417 = vpop.f32.mrf.mxu0
    %v418 = vpop.f32.mrf.mxu0
    %v419 = vpop.f32.mrf.mxu0
    %420 = vdwg.mxu0
    %v421 = vmax.f32 %v416, 0.0
    %v422 = vlaneseq
    %v423 = vshrl.u32 %v422, 7
    %v424 = vsub.s32 0, %v423
    %v425 = vrot.slane %v421, %v424
    %v426 = vsub.f32 %v379, %v425
    %v427 = vmul.f32 %v426, 0.5
    %v428 = vand.u32 2147483647, %v426
    %v429 = vmul.f32 %v427, %v428
    %v430 = vmax.f32 %v429, 0.0
    %v431 = vmin.f32 %v430, 0.5
    %v432 = vsub.f32 %v426, 0.5
    %v433 = vmax.f32 %v431, %v432
    %v434 = vmul.f32 %v58, %v58
    %v435 = vsel %vm86, %v434, 0.0
    %436 = vadd.xlane.f32.xlu0 %v435
    %v437 = vpop.xlane.xlu0 %436
    %v438 = vmul.f32 %v437, 0.01
    %v439 = vadd.f32 %v433, %v438
    %440 = vst [vmem:[#allocation8] sm:$0xff] %v439
    // Predicated region
    $region30: #{tpu_custom_call.1} parent=1 // pred_check
      _
    $region31: #{tpu_custom_call.1} parent=1 // pred_check_branch
      %442 = sbr.rel (0) target = $region33
    $region32: #{tpu_custom_call.1} parent=1 // pred_region
      %s444 = ssub.s32 128, 128
      %445 = vsyncadd [#allocation4], %s444
      %s447 = sshll.u32 [#allocation8], 4
      %s448 = int_to_ptr.vmem [resolvable:$true] %s447
      %450 = dma.vmem_to_hbm [thread:$0]  %s448, 128, %s4, [#allocation4]
    $region33: #{tpu_custom_call.1} parent=1 // pred_fallthru
      _
    // Predicated region
    $region34: #{tpu_custom_call.1} parent=1 // pred_check
      _
    $region35: #{tpu_custom_call.1} parent=1 // pred_check_branch
      %452 = sbr.rel (0) target = $region37
    $region36: #{tpu_custom_call.1} parent=1 // pred_region
      %453 = dma.done [#allocation4], 128
    $region37: #{tpu_custom_call.1} parent=1 // pred_fallthru
      _
    %454 = vsyncpa [#allocation3], 1
    %455 = vsyncpa [#allocation6], 1
    %456 = vsyncpa [#allocation4], 1

</llo_original>
